<compile_context>
chip_gen: v5e
topology: v5e:2x2
jax: 0.10.0
libtpu: 0.0.40
codegen_flags: <defaults>
</compile_context>

<pallas_src>
import jax
import jax.numpy as jnp
from jax.experimental import pallas as pl
from jax.experimental.pallas import tpu as pltpu


def _make_fda_kernel(with_mask):
    def kernel(*refs):
        if with_mask:
            (q_tile_ref, q_full_ref, v_ref, wa_ref, ba_ref, wb_ref, bb_ref,
             mask_ref, out_ref, attn_ref) = refs
        else:
            (q_tile_ref, q_full_ref, v_ref, wa_ref, ba_ref, wb_ref, bb_ref,
             out_ref, attn_ref) = refs

        q_t = q_tile_ref[...]          # (TQ, d_k)  query rows of this tile
        q_f = q_full_ref[...]          # (S,  d_k)  all rows ("key" side), resident per head
        v = v_ref[...]                 # (S,  d_v)  resident per head

        # Linears with the repeat_interleave expansion folded into the weights.
        h_a = jnp.dot(q_t, wa_ref[...], preferred_element_type=jnp.float32) + ba_ref[...]  # (TQ, Lp)
        h_b = jnp.dot(q_f, wb_ref[...], preferred_element_type=jnp.float32) + bb_ref[...]  # (S,  Lp)

        # scores[i, j] = sum_k h_a[i, k] * h_b[j, k]   -> (TQ, S)
        scores = jax.lax.dot_general(h_a, h_b, (((1,), (1,)), ((), ())),
                                     preferred_element_type=jnp.float32)

        if with_mask:
            scores = jnp.where(mask_ref[...] != 0, jnp.float32(-1.0e9), scores)

        # Row softmax.  Normalize via EUP approx reciprocal + one Newton step on the
        # skinny (TQ, 1) denominator (frees VALU slots vs. a (TQ, S) divide, ~f32 accurate).
        m = jnp.max(scores, axis=-1, keepdims=True)
        e = jnp.exp(scores - m)
        denom = jnp.sum(e, axis=-1, keepdims=True)
        inv = pl.reciprocal(denom, approx=True)
        inv = inv * (2.0 - denom * inv)
        attn = e * inv

        attn_ref[...] = attn.astype(attn_ref.dtype)
        out_ref[...] = jnp.dot(attn.astype(v.dtype), v,
                               preferred_element_type=jnp.float32).astype(out_ref.dtype)

    return kernel


def _pick_tq(S, requested=None):
    """Largest query-tile <= requested (default 256) that divides S and is 8-aligned."""
    cap = min(requested if requested is not None else 256, S)
    if cap >= S:
        return S
    for tq in range(cap, 7, -1):
        if S % tq == 0 and tq % 8 == 0:
            return tq
    return S


def factorized_dense_attention(q, v, params, *, max_seq_len, f, len_q,
                               mask=None, tq=None, attn_dtype=jnp.float32):
    """q, v: (B, H, S, d). Returns (output (B,H,S,d_v), dense_attn (B,H,S,S))."""
    B, H, S, d_k = q.shape
    d_v = v.shape[-1]
    r = max_seq_len // f

    TQ = _pick_tq(S, tq)
    n_t = S // TQ

    # Pad len_q up to a lane multiple: zero columns contribute nothing to the
    # scores contraction but give lane-dense, unmasked MXU passes and stores.
    Lp = max(128, -(-len_q // 128) * 128)

    wa = params["wa"].astype(jnp.float32)                 # (d_k, f)
    ba = params["ba"].astype(jnp.float32).reshape(1, f)   # (1, f)
    wb = params["wb"].astype(jnp.float32)                 # (d_k, r)
    bb = params["bb"].astype(jnp.float32).reshape(1, r)   # (1, r)

    # 0/1 expansion matrices encoding repeat_interleave + [:len_q] slice, padded to Lp.
    j = jnp.arange(Lp)
    valid = (j < len_q)[None, :]
    ea = (((j[None, :] // r) == jnp.arange(f)[:, None]) & valid).astype(jnp.float32)  # (f, Lp)
    eb = (((j[None, :] // f) == jnp.arange(r)[:, None]) & valid).astype(jnp.float32)  # (r, Lp)

    # Fold the expansion into the linear weights (host-side, tiny, exact 0/1 selection).
    wa_f = (wa @ ea).astype(q.dtype)                      # (d_k, Lp)
    ba_f = ba @ ea                                        # (1, Lp) f32
    wb_f = (wb @ eb).astype(q.dtype)                      # (d_k, Lp)
    bb_f = bb @ eb                                        # (1, Lp) f32

    with_mask = mask is not None
    inputs = [q, q, v, wa_f, ba_f, wb_f, bb_f]

    in_specs = [
        pl.BlockSpec((None, None, TQ, d_k), lambda b, h, t: (b, h, t, 0)),   # q tile
        pl.BlockSpec((None, None, S, d_k), lambda b, h, t: (b, h, 0, 0)),    # q full (resident per head)
        pl.BlockSpec((None, None, S, d_v), lambda b, h, t: (b, h, 0, 0)),    # v (resident per head)
        pl.BlockSpec((d_k, Lp), lambda b, h, t: (0, 0)),                     # Wa'
        pl.BlockSpec((1, Lp), lambda b, h, t: (0, 0)),                       # ba'
        pl.BlockSpec((d_k, Lp), lambda b, h, t: (0, 0)),                     # Wb'
        pl.BlockSpec((1, Lp), lambda b, h, t: (0, 0)),                       # bb'
    ]

    mask_bytes = 0
    if with_mask:
        mk = jnp.asarray(mask)
        while mk.ndim < 4:
            mk = mk[None]
        Bm, Hm = mk.shape[0], mk.shape[1]
        assert mk.shape[2] == S and mk.shape[3] == S, "mask must broadcast to (B, H, S, S)"
        mask_i8 = (mk != 0).astype(jnp.int8)   # int8 at natural broadcast shape: no (B,H,S,S) f32 in HBM
        bsel = (lambda x: x) if Bm > 1 else (lambda x: 0)
        hsel = (lambda x: x) if Hm > 1 else (lambda x: 0)
        in_specs.append(
            pl.BlockSpec((None, None, TQ, S), lambda b, h, t: (bsel(b), hsel(h), t, 0)))
        inputs.append(mask_i8)
        mask_bytes = TQ * S

    out_specs = [
        pl.BlockSpec((None, None, TQ, d_v), lambda b, h, t: (b, h, t, 0)),
        pl.BlockSpec((None, None, TQ, S), lambda b, h, t: (b, h, t, 0)),
    ]
    out_shape = (jax.ShapeDtypeStruct((B, H, S, d_v), q.dtype),
                 jax.ShapeDtypeStruct((B, H, S, S), attn_dtype))

    # Working-set estimate -> raise scoped VMEM limit above the 16/32 MiB default
    # (clamped; TQ should be lowered for very large S or on v7x's 64 MiB VMEM).
    in_isize = jnp.dtype(q.dtype).itemsize
    attn_isize = jnp.dtype(attn_dtype).itemsize
    pipelined = ((TQ * d_k + S * d_k + S * d_v + TQ * d_v) * in_isize
                 + 2 * d_k * Lp * in_isize + 2 * Lp * 4
                 + TQ * S * attn_isize + mask_bytes)
    scratch = (TQ * Lp + S * Lp + 2 * TQ * S) * 4
    est = 2 * pipelined + scratch
    vmem_limit = int(min(max(1.5 * est, 32 * 1024 * 1024), 96 * 1024 * 1024))

    kernel = pl.pallas_call(
        _make_fda_kernel(with_mask),
        out_shape=out_shape,
        grid_spec=pltpu.PrefetchScalarGridSpec(
            num_scalar_prefetch=0,
            grid=(B, H, n_t),
            in_specs=in_specs,
            out_specs=out_specs),
        compiler_params=pltpu.CompilerParams(
            dimension_semantics=("parallel", "parallel", "parallel"),
            vmem_limit_bytes=vmem_limit),
    )
    out, attn = kernel(*inputs)
    return out, attn


def _reference(q, v, wa, ba, wb, bb, max_seq_len, f, len_q, mask):
    """Pure-JAX transcription of the PyTorch forward (eval mode)."""
    r = max_seq_len // f
    fa = q @ wa + ba
    fb = q @ wb + bb
    h_a = jnp.repeat(fa, r, axis=-1)[..., :len_q]
    h_b = jnp.repeat(fb, f, axis=-1)[..., :len_q]
    dense = jnp.einsum('bhik,bhjk->bhij', h_a, h_b)
    if mask is not None:
        dense = jnp.where(mask != 0, -1.0e9, dense)
    attn = jax.nn.softmax(dense, axis=-1)
    out = attn @ v
    return out, attn


if __name__ == "__main__":
    key = jax.random.PRNGKey(0)
    B, H = 2, 2
    max_seq_len, f = 8, 4
    S = max_seq_len
    d_k, d_v = 32, 32
    len_q = 6

    k1, k2, k3, k4, k5, k6, k7 = jax.random.split(key, 7)
    q = jax.random.normal(k1, (B, H, S, d_k), jnp.float32)
    v = jax.random.normal(k2, (B, H, S, d_v), jnp.float32)

    # Deterministic Linear parameters (uniform like torch's default init range).
    bound = 1.0 / (d_k ** 0.5)
    wa = jax.random.uniform(k3, (d_k, f), jnp.float32, -bound, bound)
    ba = jax.random.uniform(k4, (f,), jnp.float32, -bound, bound)
    wb = jax.random.uniform(k5, (d_k, max_seq_len // f), jnp.float32, -bound, bound)
    bb = jax.random.uniform(k6, (max_seq_len // f,), jnp.float32, -bound, bound)
    params = dict(wa=wa, ba=ba, wb=wb, bb=bb)

    # Mask broadcast over heads (B, 1, S, S); nonzero entries get filled with -1e9.
    mask = (jax.random.uniform(k7, (B, 1, S, S)) > 0.8).astype(jnp.float32)

    # Masked path.
    out, attn = factorized_dense_attention(
        q, v, params, max_seq_len=max_seq_len, f=f, len_q=len_q, mask=mask)
    out = jax.block_until_ready(out)
    attn = jax.block_until_ready(attn)
    ref_out, ref_attn = _reference(q, v, wa, ba, wb, bb, max_seq_len, f, len_q, mask)
    assert out.shape == (B, H, S, d_v) and attn.shape == (B, H, S, S)
    assert jnp.allclose(attn, ref_attn, atol=5e-5, rtol=1e-4), "attn mismatch (masked)"
    assert jnp.allclose(out, ref_out, atol=5e-4, rtol=1e-3), "output mismatch (masked)"

    # No-mask path (specialized kernel variant: no mask DMA, no select).
    out_nm, attn_nm = factorized_dense_attention(
        q, v, params, max_seq_len=max_seq_len, f=f, len_q=len_q, mask=None)
    out_nm = jax.block_until_ready(out_nm)
    attn_nm = jax.block_until_ready(attn_nm)
    ref_out_nm, ref_attn_nm = _reference(q, v, wa, ba, wb, bb, max_seq_len, f, len_q, None)
    assert jnp.allclose(attn_nm, ref_attn_nm, atol=5e-5, rtol=1e-4), "attn mismatch (no mask)"
    assert jnp.allclose(out_nm, ref_out_nm, atol=5e-4, rtol=1e-3), "output mismatch (no mask)"

    print("KERNEL_OK")
</pallas_src>

<mosaic_0001>
module attributes {stable_mosaic.version = 11 : i64} {
  func.func @kernel(%arg0: i32, %arg1: i32, %arg2: i32, %arg3: memref<1x1x8x32xf32, #tpu.memory_space<vmem>>, %arg4: memref<1x1x8x32xf32, #tpu.memory_space<vmem>>, %arg5: memref<1x1x8x32xf32, #tpu.memory_space<vmem>>, %arg6: memref<32x128xf32, #tpu.memory_space<vmem>>, %arg7: memref<1x128xf32, #tpu.memory_space<vmem>>, %arg8: memref<32x128xf32, #tpu.memory_space<vmem>>, %arg9: memref<1x128xf32, #tpu.memory_space<vmem>>, %arg10: memref<1x1x8x8xi8, #tpu.memory_space<vmem>>, %arg11: memref<1x1x8x32xf32, #tpu.memory_space<vmem>>, %arg12: memref<1x1x8x8xf32, #tpu.memory_space<vmem>>) attributes {dimension_semantics = [#tpu.dimension_semantics<parallel>, #tpu.dimension_semantics<parallel>, #tpu.dimension_semantics<parallel>], iteration_bounds = array<i64: 2, 2, 1>, scalar_prefetch = 0 : i64, scratch_operands = 0 : i64, tpu.core_type = #tpu.core_type<tc>, window_params = [{transform_indices = @transform_0, window_bounds = array<i64: 1, 1, 8, 32>}, {transform_indices = @transform_1, window_bounds = array<i64: 1, 1, 8, 32>}, {transform_indices = @transform_2, window_bounds = array<i64: 1, 1, 8, 32>}, {pipeline_mode = #tpu.pipeline_mode<synchronous>, transform_indices = @transform_3, window_bounds = array<i64: 32, 128>}, {pipeline_mode = #tpu.pipeline_mode<synchronous>, transform_indices = @transform_4, window_bounds = array<i64: 1, 128>}, {pipeline_mode = #tpu.pipeline_mode<synchronous>, transform_indices = @transform_5, window_bounds = array<i64: 32, 128>}, {pipeline_mode = #tpu.pipeline_mode<synchronous>, transform_indices = @transform_6, window_bounds = array<i64: 1, 128>}, {transform_indices = @transform_7, window_bounds = array<i64: 1, 1, 8, 8>}, {transform_indices = @transform_8, window_bounds = array<i64: 1, 1, 8, 32>}, {transform_indices = @transform_9, window_bounds = array<i64: 1, 1, 8, 8>}]} {
    %c0 = arith.constant 0 : index
    %c0_0 = arith.constant 0 : index
    %c0_1 = arith.constant 0 : index
    %c0_2 = arith.constant 0 : index
    %0 = vector.load %arg3[%c0, %c0_0, %c0_1, %c0_2] : memref<1x1x8x32xf32, #tpu.memory_space<vmem>>, vector<1x1x8x32xf32>
    %1 = vector.shape_cast %0 : vector<1x1x8x32xf32> to vector<8x32xf32>
    %c0_3 = arith.constant 0 : index
    %c0_4 = arith.constant 0 : index
    %c0_5 = arith.constant 0 : index
    %c0_6 = arith.constant 0 : index
    %2 = vector.load %arg4[%c0_3, %c0_4, %c0_5, %c0_6] : memref<1x1x8x32xf32, #tpu.memory_space<vmem>>, vector<1x1x8x32xf32>
    %3 = vector.shape_cast %2 : vector<1x1x8x32xf32> to vector<8x32xf32>
    %c0_7 = arith.constant 0 : index
    %c0_8 = arith.constant 0 : index
    %c0_9 = arith.constant 0 : index
    %c0_10 = arith.constant 0 : index
    %4 = vector.load %arg5[%c0_7, %c0_8, %c0_9, %c0_10] : memref<1x1x8x32xf32, #tpu.memory_space<vmem>>, vector<1x1x8x32xf32>
    %5 = vector.shape_cast %4 : vector<1x1x8x32xf32> to vector<8x32xf32>
    %c0_11 = arith.constant 0 : index
    %c0_12 = arith.constant 0 : index
    %6 = vector.load %arg6[%c0_11, %c0_12] : memref<32x128xf32, #tpu.memory_space<vmem>>, vector<32x128xf32>
    %cst = arith.constant dense<0.000000e+00> : vector<8x128xf32>
    %7 = tpu.matmul %1, %6, %cst {dimension_numbers = #tpu.dot_dimension_numbers<[1], [0], [0], [1], [0, 0, 1, 1], [], []>} : vector<8x32xf32>, vector<32x128xf32>, vector<8x128xf32> -> vector<8x128xf32>
    %c0_13 = arith.constant 0 : index
    %c0_14 = arith.constant 0 : index
    %8 = vector.load %arg7[%c0_13, %c0_14] : memref<1x128xf32, #tpu.memory_space<vmem>>, vector<1x128xf32>
    %9 = vector.broadcast %8 : vector<1x128xf32> to vector<8x128xf32>
    %10 = arith.addf %7, %9 : vector<8x128xf32>
    %c0_15 = arith.constant 0 : index
    %c0_16 = arith.constant 0 : index
    %11 = vector.load %arg8[%c0_15, %c0_16] : memref<32x128xf32, #tpu.memory_space<vmem>>, vector<32x128xf32>
    %cst_17 = arith.constant dense<0.000000e+00> : vector<8x128xf32>
    %12 = tpu.matmul %3, %11, %cst_17 {dimension_numbers = #tpu.dot_dimension_numbers<[1], [0], [0], [1], [0, 0, 1, 1], [], []>} : vector<8x32xf32>, vector<32x128xf32>, vector<8x128xf32> -> vector<8x128xf32>
    %c0_18 = arith.constant 0 : index
    %c0_19 = arith.constant 0 : index
    %13 = vector.load %arg9[%c0_18, %c0_19] : memref<1x128xf32, #tpu.memory_space<vmem>>, vector<1x128xf32>
    %14 = vector.broadcast %13 : vector<1x128xf32> to vector<8x128xf32>
    %15 = arith.addf %12, %14 : vector<8x128xf32>
    %cst_20 = arith.constant dense<0.000000e+00> : vector<8x8xf32>
    %16 = tpu.matmul %10, %15, %cst_20 {dimension_numbers = #tpu.dot_dimension_numbers<[1], [1], [0], [0], [0, 0, 1, 0], [], []>} : vector<8x128xf32>, vector<8x128xf32>, vector<8x8xf32> -> vector<8x8xf32>
    %c0_21 = arith.constant 0 : index
    %c0_22 = arith.constant 0 : index
    %c0_23 = arith.constant 0 : index
    %c0_24 = arith.constant 0 : index
    %17 = vector.load %arg10[%c0_21, %c0_22, %c0_23, %c0_24] : memref<1x1x8x8xi8, #tpu.memory_space<vmem>>, vector<1x1x8x8xi8>
    %18 = vector.shape_cast %17 : vector<1x1x8x8xi8> to vector<8x8xi8>
    %c0_i8 = arith.constant 0 : i8
    %19 = vector.broadcast %c0_i8 : i8 to vector<8x8xi8>
    %20 = arith.cmpi ne, %18, %19 : vector<8x8xi8>
    %cst_25 = arith.constant -1.000000e+09 : f32
    %21 = vector.broadcast %cst_25 : f32 to vector<8x8xf32>
    %22 = arith.select %20, %21, %16 : vector<8x8xi1>, vector<8x8xf32>
    %cst_26 = arith.constant dense<0xFF800000> : vector<8xf32>
    %23 = vector.multi_reduction <maximumf>, %22, %cst_26 [1] : vector<8x8xf32> to vector<8xf32>
    %24 = vector.shape_cast %23 : vector<8xf32> to vector<8x1xf32>
    %25 = vector.broadcast %24 : vector<8x1xf32> to vector<8x8xf32>
    %26 = arith.subf %22, %25 : vector<8x8xf32>
    %27 = math.exp %26 : vector<8x8xf32>
    %cst_27 = arith.constant dense<0.000000e+00> : vector<8xf32>
    %28 = vector.multi_reduction <add>, %27, %cst_27 [1] : vector<8x8xf32> to vector<8xf32>
    %29 = vector.shape_cast %28 : vector<8xf32> to vector<8x1xf32>
    %30 = tpu.reciprocal %29 {approx = true} : vector<8x1xf32> -> vector<8x1xf32>
    %31 = arith.mulf %29, %30 : vector<8x1xf32>
    %cst_28 = arith.constant 2.000000e+00 : f32
    %32 = vector.broadcast %cst_28 : f32 to vector<8x1xf32>
    %33 = arith.subf %32, %31 : vector<8x1xf32>
    %34 = arith.mulf %30, %33 : vector<8x1xf32>
    %35 = vector.broadcast %34 : vector<8x1xf32> to vector<8x8xf32>
    %36 = arith.mulf %27, %35 : vector<8x8xf32>
    %c0_29 = arith.constant 0 : index
    %c0_30 = arith.constant 0 : index
    %c0_31 = arith.constant 0 : index
    %c0_32 = arith.constant 0 : index
    %37 = vector.load %arg12[%c0_29, %c0_30, %c0_31, %c0_32] : memref<1x1x8x8xf32, #tpu.memory_space<vmem>>, vector<1x1x8x8xf32>
    %38 = vector.shape_cast %37 : vector<1x1x8x8xf32> to vector<8x8xf32>
    %39 = vector.shape_cast %36 : vector<8x8xf32> to vector<1x1x8x8xf32>
    tpu.vector_store %arg12[%c0_29, %c0_30, %c0_31, %c0_32], %39 {strides = array<i32>} : memref<1x1x8x8xf32, #tpu.memory_space<vmem>>, vector<1x1x8x8xf32>,
    %cst_33 = arith.constant dense<0.000000e+00> : vector<8x32xf32>
    %40 = tpu.matmul %36, %5, %cst_33 {dimension_numbers = #tpu.dot_dimension_numbers<[1], [0], [0], [1], [0, 0, 1, 1], [], []>} : vector<8x8xf32>, vector<8x32xf32>, vector<8x32xf32> -> vector<8x32xf32>
    %c0_34 = arith.constant 0 : index
    %c0_35 = arith.constant 0 : index
    %c0_36 = arith.constant 0 : index
    %c0_37 = arith.constant 0 : index
    %41 = vector.load %arg11[%c0_34, %c0_35, %c0_36, %c0_37] : memref<1x1x8x32xf32, #tpu.memory_space<vmem>>, vector<1x1x8x32xf32>
    %42 = vector.shape_cast %41 : vector<1x1x8x32xf32> to vector<8x32xf32>
    %43 = vector.shape_cast %40 : vector<8x32xf32> to vector<1x1x8x32xf32>
    tpu.vector_store %arg11[%c0_34, %c0_35, %c0_36, %c0_37], %43 {strides = array<i32>} : memref<1x1x8x32xf32, #tpu.memory_space<vmem>>, vector<1x1x8x32xf32>,
    return
  }
  func.func @transform_0(%arg0: i32, %arg1: i32, %arg2: i32) -> (i32, i32, i32, i32) {
    %c0_i32 = arith.constant 0 : i32
    %c0_i32_0 = arith.constant 0 : i32
    return %arg0, %arg1, %arg2, %c0_i32 : i32, i32, i32, i32
  }
  func.func @transform_1(%arg0: i32, %arg1: i32, %arg2: i32) -> (i32, i32, i32, i32) {
    %c0_i32 = arith.constant 0 : i32
    %c0_i32_0 = arith.constant 0 : i32
    %c0_i32_1 = arith.constant 0 : i32
    return %arg0, %arg1, %c0_i32, %c0_i32_0 : i32, i32, i32, i32
  }
  func.func @transform_2(%arg0: i32, %arg1: i32, %arg2: i32) -> (i32, i32, i32, i32) {
    %c0_i32 = arith.constant 0 : i32
    %c0_i32_0 = arith.constant 0 : i32
    %c0_i32_1 = arith.constant 0 : i32
    return %arg0, %arg1, %c0_i32, %c0_i32_0 : i32, i32, i32, i32
  }
  func.func @transform_3(%arg0: i32, %arg1: i32, %arg2: i32) -> (i32, i32) {
    %c0_i32 = arith.constant 0 : i32
    %c0_i32_0 = arith.constant 0 : i32
    %c0_i32_1 = arith.constant 0 : i32
    return %c0_i32, %c0_i32_0 : i32, i32
  }
  func.func @transform_4(%arg0: i32, %arg1: i32, %arg2: i32) -> (i32, i32) {
    %c0_i32 = arith.constant 0 : i32
    %c0_i32_0 = arith.constant 0 : i32
    %c0_i32_1 = arith.constant 0 : i32
    return %c0_i32, %c0_i32_0 : i32, i32
  }
  func.func @transform_5(%arg0: i32, %arg1: i32, %arg2: i32) -> (i32, i32) {
    %c0_i32 = arith.constant 0 : i32
    %c0_i32_0 = arith.constant 0 : i32
    %c0_i32_1 = arith.constant 0 : i32
    return %c0_i32, %c0_i32_0 : i32, i32
  }
  func.func @transform_6(%arg0: i32, %arg1: i32, %arg2: i32) -> (i32, i32) {
    %c0_i32 = arith.constant 0 : i32
    %c0_i32_0 = arith.constant 0 : i32
    %c0_i32_1 = arith.constant 0 : i32
    return %c0_i32, %c0_i32_0 : i32, i32
  }
  func.func @transform_7(%arg0: i32, %arg1: i32, %arg2: i32) -> (i32, i32, i32, i32) {
    %c0_i32 = arith.constant 0 : i32
    %c0_i32_0 = arith.constant 0 : i32
    %c0_i32_1 = arith.constant 0 : i32
    return %arg0, %c0_i32, %arg2, %c0_i32_0 : i32, i32, i32, i32
  }
  func.func @transform_8(%arg0: i32, %arg1: i32, %arg2: i32) -> (i32, i32, i32, i32) {
    %c0_i32 = arith.constant 0 : i32
    %c0_i32_0 = arith.constant 0 : i32
    return %arg0, %arg1, %arg2, %c0_i32 : i32, i32, i32, i32
  }
  func.func @transform_9(%arg0: i32, %arg1: i32, %arg2: i32) -> (i32, i32, i32, i32) {
    %c0_i32 = arith.constant 0 : i32
    %c0_i32_0 = arith.constant 0 : i32
    return %arg0, %arg1, %arg2, %c0_i32 : i32, i32, i32, i32
  }
}

</mosaic_0001>

<llo_original>
// kernel: tpu_custom_call.1
$region0: #{tpu_custom_call.1}
  #allocation0 [shape = 'u32[]', space=smem, size = 0x4, offset = 0x4, fixed_abs, tag = 'smem constant byte address 0x4 - core index']
  #allocation1 [shape = 'u32[72,128]{1,0:T(1,128)}', space=vmem, size = 0x9000, scoped, tag = 'internal scratch']
  %s0 = inlined_call_operand.hbm [shape: f32[2,2,8,32], index: 0, kind: input, shape index: {}]
  %s1 = inlined_call_operand.hbm [shape: f32[2,2,8,32], index: 1, kind: input, shape index: {}]
  %s2 = inlined_call_operand.hbm [shape: f32[2,2,8,32], index: 2, kind: input, shape index: {}]
  %s3 = inlined_call_operand.hbm [shape: f32[32,128], index: 3, kind: input, shape index: {}]
  %s4 = inlined_call_operand.vmem [shape: f32[1,128], index: 4, kind: input, shape index: {}]
  %s5 = inlined_call_operand.hbm [shape: f32[32,128], index: 5, kind: input, shape index: {}]
  %s6 = inlined_call_operand.vmem [shape: f32[1,128], index: 6, kind: input, shape index: {}]
  %s7 = inlined_call_operand.vmem [shape: s8[2,1,8,8], index: 7, kind: input, shape index: {}]
  %s8 = inlined_call_operand.hbm [shape: f32[2,2,8,32], index: 8, kind: output, shape index: {0}]
  %s9 = inlined_call_operand.hbm [shape: f32[2,2,8,8], index: 9, kind: output, shape index: {1}]
  %10 = xla_tuple %s8, %s9
  %s11 = sld [smem:[#allocation0]]
  $region93: #{tpu_custom_call.1} parent=0
    _
  %s13 = ssub.s32 1, %s11
  %s14 = scalar_select 0, %s13, %s11
  $region1: #{tpu_custom_call.1} parent=0
    #allocation2 [shape = 'u8[8192]{0}', space=vmem, size = 0x2000, scoped, tag = 'input window, operand 0']
    #allocation3 [shape = 's32[2]{0}', space=sflag, size = 0x8, scoped, tag = 'scoped memory for tpu_custom_call.1']
    #allocation4 [shape = 's32[2]{0}', space=sflag, size = 0x8, scoped, tag = 'scoped memory for tpu_custom_call.1']
    #allocation5 [shape = 'u8[8192]{0}', space=vmem, size = 0x2000, scoped, tag = 'input window, operand 1']
    #allocation6 [shape = 's32[2]{0}', space=sflag, size = 0x8, scoped, tag = 'scoped memory for tpu_custom_call.1']
    #allocation7 [shape = 'u8[8192]{0}', space=vmem, size = 0x2000, scoped, tag = 'input window, operand 2']
    #allocation8 [shape = 'u8[16384]{0}', space=vmem, size = 0x4000, scoped, tag = 'input window, operand 3, single buffered']
    #allocation9 [shape = 's32[1]{0}', space=sflag, size = 0x4, scoped, tag = 'scoped memory for tpu_custom_call.1']
    #allocation10 [shape = 'u8[16384]{0}', space=vmem, size = 0x4000, scoped, tag = 'input window, operand 5, single buffered']
    #allocation11 [shape = 'u8[8192]{0}', space=vmem, size = 0x2000, scoped, tag = 'output window, operand 0']
    #allocation12 [shape = 'u8[8192]{0}', space=vmem, size = 0x2000, scoped, tag = 'output window, operand 1']
    #allocation13 [shape = 's32[2]{0}', space=sflag, size = 0x8, scoped, tag = 'scoped memory for tpu_custom_call.1']
    %15 = vsyncpa [#allocation3], 0
    %s16 = scalar_lea.sflag [#allocation3], 1
    %17 = vsyncpa %s16, 0
    %18 = vsyncpa [#allocation6], 0
    %s19 = scalar_lea.sflag [#allocation6], 1
    %20 = vsyncpa %s19, 0
    %21 = vsyncpa [#allocation9], 0
    %22 = vsyncpa [#allocation4], 0
    %s23 = scalar_lea.sflag [#allocation4], 1
    %24 = vsyncpa %s23, 0
    %25 = vsyncpa [#allocation13], 0
    %s26 = scalar_lea.sflag [#allocation13], 1
    %27 = vsyncpa %s26, 0
    loop: start=0, step=1, limit=6
    $region2: #{tpu_custom_call.1} parent=1 // loop_pre_header
      _
    $region3: #{tpu_custom_call.1} parent=1 // loop_header
      %s29 = sphi 0, %s33
      %p30 = scmp.ge.s32.totalorder %s29, 6
      %s36 = sphi 0, %s55
      %s37 = sphi 0, %s51
      %s38 = sphi 0, %s47
      %s39 = sphi 0, %s36
      %s40 = sphi 0, %s37
      %s41 = sphi 0, %s38
      %s42 = sphi 0, %s39
      %s43 = sphi 0, %s40
      %s44 = sphi 0, %s41
      %s62 = sphi 0, %s64
      %s65 = sphi 0, %s62
      %s66 = sphi 0, %s65
      %s82 = sphi 0, %s66
      %s90 = sphi 0, %s92
      %s93 = sphi 0, %s90
      %s94 = sphi 0, %s93
      %s110 = sphi 0, %s94
      %s118 = sphi 0, %s120
      %s121 = sphi 0, %s118
      %s122 = sphi 0, %s121
      %s138 = sphi 0, %s122
      %s142 = sphi 0, %s142
      %s144 = sphi 0, %s142
      %s145 = sphi 0, %s144
      %s159 = sphi 0, %s145
      %s163 = sphi 0, %s163
      %s165 = sphi 0, %s163
      %s166 = sphi 0, %s165
      %s180 = sphi 0, %s166
      %s184 = sphi 0, %s184
      %s186 = sphi 0, %s184
      %s187 = sphi 0, %s186
      %s201 = sphi 0, %s187
      %s205 = sphi 0, %s205
      %s207 = sphi 0, %s205
      %s208 = sphi 0, %s207
      %s222 = sphi 0, %s208
      %s230 = sphi 0, %s232
      %s233 = sphi 0, %s230
      %s234 = sphi 0, %s233
      %s250 = sphi 0, %s234
      %s260 = sphi 0, %s262
      %s263 = sphi 0, %s260
      %s264 = sphi 0, %s263
      %s280 = sphi 0, %s264
      %s290 = sphi 0, %s292
      %s293 = sphi 0, %s290
      %s294 = sphi 0, %s293
      %s310 = sphi 0, %s294
    $region4: #{tpu_custom_call.1} parent=1 // loop_header_branch
      %32 = sbr.rel (%p30) target = $region8
    $region5: #{tpu_custom_call.1} parent=1 // loop_body
      %s34 = ssub.s32 %s29, 1
      %s35 = ssub.s32 %s29, 2
      %s45 = sadd.s32 1, %s38
      %p46 = scmp.ge.s32.totalorder %s45, 1
      %s47 = scalar_select %p46, 0, %s45
      %s48 = sadd.s32 1, %s37
      %s49 = scalar_select %p46, %s48, %s37
      %p50 = scmp.ge.s32.totalorder %s49, 2
      %s51 = scalar_select %p50, 0, %s49
      %s52 = sadd.s32 1, %s36
      %s53 = scalar_select %p50, %s52, %s36
      %p54 = scmp.ge.s32.totalorder %s53, 2
      %s55 = scalar_select %p54, 0, %s53
      %s56 = ssub.s32 %s36, %s55
      %s57 = ssub.s32 %s37, %s51
      %s58 = sor.u32 %s56, %s57
      %s59 = ssub.s32 %s38, %s47
      %s60 = sor.u32 %s58, %s59
      %p61 = scmp.eq.s32.totalorder %s60, 0
      %s63 = sadd.s32 %s62, 1
      %s64 = scalar_select %p61, %s62, %s63
      %p67 = pneg %p61
      %p68 = scmp.eq.s32.totalorder %s29, 3
      %p69 = por %p67, %p68
      %p70 = scmp.ne.s32.totalorder %s62, %s65
      %p71 = scmp.eq.s32.totalorder %s29, 0
      %p72 = por %p70, %p71
      %p73 = scmp.ne.s32.totalorder %s62, %s65
      %p74 = scmp.eq.s32.totalorder %s34, 3
      %p75 = por %p73, %p74
      %p76 = scmp.ne.s32.totalorder %s65, %s66
      %p77 = scmp.eq.s32.totalorder %s34, 0
      %p78 = por %p76, %p77
      %p79 = scmp.ne.s32.totalorder %s65, %s66
      %p80 = scmp.eq.s32.totalorder %s35, 3
      %p81 = por %p79, %p80
      %p83 = scmp.ne.s32.totalorder %s66, %s82
      %p84 = scmp.eq.s32.totalorder %s35, 0
      %p85 = por %p83, %p84
      %s86 = ssub.s32 %s36, %s55
      %s87 = ssub.s32 %s37, %s51
      %s88 = sor.u32 %s86, %s87
      %p89 = scmp.eq.s32.totalorder %s88, 0
      %s91 = sadd.s32 %s90, 1
      %s92 = scalar_select %p89, %s90, %s91
      %p95 = pneg %p89
      %p96 = scmp.eq.s32.totalorder %s29, 3
      %p97 = por %p95, %p96
      %p98 = scmp.ne.s32.totalorder %s90, %s93
      %p99 = scmp.eq.s32.totalorder %s29, 0
      %p100 = por %p98, %p99
      %p101 = scmp.ne.s32.totalorder %s90, %s93
      %p102 = scmp.eq.s32.totalorder %s34, 3
      %p103 = por %p101, %p102
      %p104 = scmp.ne.s32.totalorder %s93, %s94
      %p105 = scmp.eq.s32.totalorder %s34, 0
      %p106 = por %p104, %p105
      %p107 = scmp.ne.s32.totalorder %s93, %s94
      %p108 = scmp.eq.s32.totalorder %s35, 3
      %p109 = por %p107, %p108
      %p111 = scmp.ne.s32.totalorder %s94, %s110
      %p112 = scmp.eq.s32.totalorder %s35, 0
      %p113 = por %p111, %p112
      %s114 = ssub.s32 %s36, %s55
      %s115 = ssub.s32 %s37, %s51
      %s116 = sor.u32 %s114, %s115
      %p117 = scmp.eq.s32.totalorder %s116, 0
      %s119 = sadd.s32 %s118, 1
      %s120 = scalar_select %p117, %s118, %s119
      %p123 = pneg %p117
      %p124 = scmp.eq.s32.totalorder %s29, 3
      %p125 = por %p123, %p124
      %p126 = scmp.ne.s32.totalorder %s118, %s121
      %p127 = scmp.eq.s32.totalorder %s29, 0
      %p128 = por %p126, %p127
      %p129 = scmp.ne.s32.totalorder %s118, %s121
      %p130 = scmp.eq.s32.totalorder %s34, 3
      %p131 = por %p129, %p130
      %p132 = scmp.ne.s32.totalorder %s121, %s122
      %p133 = scmp.eq.s32.totalorder %s34, 0
      %p134 = por %p132, %p133
      %p135 = scmp.ne.s32.totalorder %s121, %s122
      %p136 = scmp.eq.s32.totalorder %s35, 3
      %p137 = por %p135, %p136
      %p139 = scmp.ne.s32.totalorder %s122, %s138
      %p140 = scmp.eq.s32.totalorder %s35, 0
      %p141 = por %p139, %p140
      %s143 = sadd.s32 %s142, 1
      %p146 = scmp.eq.s32.totalorder %s29, 3
      %p147 = scmp.ne.s32.totalorder %s142, %s144
      %p148 = scmp.eq.s32.totalorder %s29, 0
      %p149 = por %p147, %p148
      %p150 = scmp.ne.s32.totalorder %s142, %s144
      %p151 = scmp.eq.s32.totalorder %s34, 3
      %p152 = por %p150, %p151
      %p153 = scmp.ne.s32.totalorder %s144, %s145
      %p154 = scmp.eq.s32.totalorder %s34, 0
      %p155 = por %p153, %p154
      %p156 = scmp.ne.s32.totalorder %s144, %s145
      %p157 = scmp.eq.s32.totalorder %s35, 3
      %p158 = por %p156, %p157
      %p160 = scmp.ne.s32.totalorder %s145, %s159
      %p161 = scmp.eq.s32.totalorder %s35, 0
      %p162 = por %p160, %p161
      %s164 = sadd.s32 %s163, 1
      %p167 = scmp.eq.s32.totalorder %s29, 3
      %p168 = scmp.ne.s32.totalorder %s163, %s165
      %p169 = scmp.eq.s32.totalorder %s29, 0
      %p170 = por %p168, %p169
      %p171 = scmp.ne.s32.totalorder %s163, %s165
      %p172 = scmp.eq.s32.totalorder %s34, 3
      %p173 = por %p171, %p172
      %p174 = scmp.ne.s32.totalorder %s165, %s166
      %p175 = scmp.eq.s32.totalorder %s34, 0
      %p176 = por %p174, %p175
      %p177 = scmp.ne.s32.totalorder %s165, %s166
      %p178 = scmp.eq.s32.totalorder %s35, 3
      %p179 = por %p177, %p178
      %p181 = scmp.ne.s32.totalorder %s166, %s180
      %p182 = scmp.eq.s32.totalorder %s35, 0
      %p183 = por %p181, %p182
      %s185 = sadd.s32 %s184, 1
      %p188 = scmp.eq.s32.totalorder %s29, 3
      %p189 = scmp.ne.s32.totalorder %s184, %s186
      %p190 = scmp.eq.s32.totalorder %s29, 0
      %p191 = por %p189, %p190
      %p192 = scmp.ne.s32.totalorder %s184, %s186
      %p193 = scmp.eq.s32.totalorder %s34, 3
      %p194 = por %p192, %p193
      %p195 = scmp.ne.s32.totalorder %s186, %s187
      %p196 = scmp.eq.s32.totalorder %s34, 0
      %p197 = por %p195, %p196
      %p198 = scmp.ne.s32.totalorder %s186, %s187
      %p199 = scmp.eq.s32.totalorder %s35, 3
      %p200 = por %p198, %p199
      %p202 = scmp.ne.s32.totalorder %s187, %s201
      %p203 = scmp.eq.s32.totalorder %s35, 0
      %p204 = por %p202, %p203
      %s206 = sadd.s32 %s205, 1
      %p209 = scmp.eq.s32.totalorder %s29, 3
      %p210 = scmp.ne.s32.totalorder %s205, %s207
      %p211 = scmp.eq.s32.totalorder %s29, 0
      %p212 = por %p210, %p211
      %p213 = scmp.ne.s32.totalorder %s205, %s207
      %p214 = scmp.eq.s32.totalorder %s34, 3
      %p215 = por %p213, %p214
      %p216 = scmp.ne.s32.totalorder %s207, %s208
      %p217 = scmp.eq.s32.totalorder %s34, 0
      %p218 = por %p216, %p217
      %p219 = scmp.ne.s32.totalorder %s207, %s208
      %p220 = scmp.eq.s32.totalorder %s35, 3
      %p221 = por %p219, %p220
      %p223 = scmp.ne.s32.totalorder %s208, %s222
      %p224 = scmp.eq.s32.totalorder %s35, 0
      %p225 = por %p223, %p224
      %s226 = ssub.s32 %s36, %s55
      %s227 = ssub.s32 %s38, %s47
      %s228 = sor.u32 %s226, %s227
      %p229 = scmp.eq.s32.totalorder %s228, 0
      %s231 = sadd.s32 %s230, 1
      %s232 = scalar_select %p229, %s230, %s231
      %p235 = pneg %p229
      %p236 = scmp.eq.s32.totalorder %s29, 3
      %p237 = por %p235, %p236
      %p238 = scmp.ne.s32.totalorder %s230, %s233
      %p239 = scmp.eq.s32.totalorder %s29, 0
      %p240 = por %p238, %p239
      %p241 = scmp.ne.s32.totalorder %s230, %s233
      %p242 = scmp.eq.s32.totalorder %s34, 3
      %p243 = por %p241, %p242
      %p244 = scmp.ne.s32.totalorder %s233, %s234
      %p245 = scmp.eq.s32.totalorder %s34, 0
      %p246 = por %p244, %p245
      %p247 = scmp.ne.s32.totalorder %s233, %s234
      %p248 = scmp.eq.s32.totalorder %s35, 3
      %p249 = por %p247, %p248
      %p251 = scmp.ne.s32.totalorder %s234, %s250
      %p252 = scmp.eq.s32.totalorder %s35, 0
      %p253 = por %p251, %p252
      %s254 = ssub.s32 %s36, %s55
      %s255 = ssub.s32 %s37, %s51
      %s256 = sor.u32 %s254, %s255
      %s257 = ssub.s32 %s38, %s47
      %s258 = sor.u32 %s256, %s257
      %p259 = scmp.eq.s32.totalorder %s258, 0
      %s261 = sadd.s32 %s260, 1
      %s262 = scalar_select %p259, %s260, %s261
      %p265 = pneg %p259
      %p266 = scmp.eq.s32.totalorder %s29, 3
      %p267 = por %p265, %p266
      %p268 = scmp.ne.s32.totalorder %s260, %s263
      %p269 = scmp.eq.s32.totalorder %s29, 0
      %p270 = por %p268, %p269
      %p271 = scmp.ne.s32.totalorder %s260, %s263
      %p272 = scmp.eq.s32.totalorder %s34, 3
      %p273 = por %p271, %p272
      %p274 = scmp.ne.s32.totalorder %s263, %s264
      %p275 = scmp.eq.s32.totalorder %s34, 0
      %p276 = por %p274, %p275
      %p277 = scmp.ne.s32.totalorder %s263, %s264
      %p278 = scmp.eq.s32.totalorder %s35, 3
      %p279 = por %p277, %p278
      %p281 = scmp.ne.s32.totalorder %s264, %s280
      %p282 = scmp.eq.s32.totalorder %s35, 0
      %p283 = por %p281, %p282
      %s284 = ssub.s32 %s36, %s55
      %s285 = ssub.s32 %s37, %s51
      %s286 = sor.u32 %s284, %s285
      %s287 = ssub.s32 %s38, %s47
      %s288 = sor.u32 %s286, %s287
      %p289 = scmp.eq.s32.totalorder %s288, 0
      %s291 = sadd.s32 %s290, 1
      %s292 = scalar_select %p289, %s290, %s291
      %p295 = pneg %p289
      %p296 = scmp.eq.s32.totalorder %s29, 3
      %p297 = por %p295, %p296
      %p298 = scmp.ne.s32.totalorder %s290, %s293
      %p299 = scmp.eq.s32.totalorder %s29, 0
      %p300 = por %p298, %p299
      %p301 = scmp.ne.s32.totalorder %s290, %s293
      %p302 = scmp.eq.s32.totalorder %s34, 3
      %p303 = por %p301, %p302
      %p304 = scmp.ne.s32.totalorder %s293, %s294
      %p305 = scmp.eq.s32.totalorder %s34, 0
      %p306 = por %p304, %p305
      %p307 = scmp.ne.s32.totalorder %s293, %s294
      %p308 = scmp.eq.s32.totalorder %s35, 3
      %p309 = por %p307, %p308
      %p311 = scmp.ne.s32.totalorder %s294, %s310
      %p312 = scmp.eq.s32.totalorder %s35, 0
      %p313 = por %p311, %p312
      %p314 = scmp.le.s32.totalorder 1, %s29
      %p315 = scmp.lt.s32.totalorder %s29, 5
      %p316 = pnand %p314, %p315
      %p317 = pneg %p316
      // Predicated region
      $region9: #{tpu_custom_call.1} parent=5 // pred_check
        _
      $region10: #{tpu_custom_call.1} parent=5 // pred_check_branch
        %319 = sbr.rel (%p316) target = $region12
      $region11: #{tpu_custom_call.1} parent=5 // pred_region
        %s320 = ssub.s32 %s29, 1
        // Predicated region
        $region13: #{tpu_custom_call.1} parent=11 // pred_check
          %p321 = pneg %p155
        $region14: #{tpu_custom_call.1} parent=11 // pred_check_branch
          %323 = sbr.rel (%p321) target = $region16
        $region15: #{tpu_custom_call.1} parent=11 // pred_region
          %325 = vsyncadd [#allocation9], 0
          %s326 = sshll.u32 %s3, 4
          %s327 = int_to_ptr.hbm [resolvable:$true] %s326
          %s328 = sshll.u32 [#allocation8], 4
          %s329 = int_to_ptr.vmem [resolvable:$true] %s328
          %334 = dma.hbm_to_vmem [thread:$0]  %s327, 512, %s329, [#allocation9], 128, 128, 8
        $region16: #{tpu_custom_call.1} parent=11 // pred_fallthru
          _
        // Predicated region
        $region17: #{tpu_custom_call.1} parent=11 // pred_check
          %p335 = pneg %p176
        $region18: #{tpu_custom_call.1} parent=11 // pred_check_branch
          %337 = sbr.rel (%p335) target = $region20
        $region19: #{tpu_custom_call.1} parent=11 // pred_region
          _
        $region20: #{tpu_custom_call.1} parent=11 // pred_fallthru
          _
        // Predicated region
        $region21: #{tpu_custom_call.1} parent=11 // pred_check
          %p338 = pneg %p197
        $region22: #{tpu_custom_call.1} parent=11 // pred_check_branch
          %340 = sbr.rel (%p338) target = $region24
        $region23: #{tpu_custom_call.1} parent=11 // pred_region
          %342 = vsyncadd [#allocation9], 0
          %s343 = sshll.u32 %s5, 4
          %s344 = int_to_ptr.hbm [resolvable:$true] %s343
          %s345 = sshll.u32 [#allocation10], 4
          %s346 = int_to_ptr.vmem [resolvable:$true] %s345
          %351 = dma.hbm_to_vmem [thread:$0]  %s344, 512, %s346, [#allocation9], 128, 128, 8
        $region24: #{tpu_custom_call.1} parent=11 // pred_fallthru
          _
        // Predicated region
        $region25: #{tpu_custom_call.1} parent=11 // pred_check
          %p352 = pneg %p218
        $region26: #{tpu_custom_call.1} parent=11 // pred_check_branch
          %354 = sbr.rel (%p352) target = $region28
        $region27: #{tpu_custom_call.1} parent=11 // pred_region
          _
        $region28: #{tpu_custom_call.1} parent=11 // pred_fallthru
          _
      $region12: #{tpu_custom_call.1} parent=5 // pred_fallthru
        _
      %p355 = scmp.lt.s32.totalorder %s29, 4
      // Predicated region
      $region29: #{tpu_custom_call.1} parent=5 // pred_check
        %p356 = pneg %p355
      $region30: #{tpu_custom_call.1} parent=5 // pred_check_branch
        %358 = sbr.rel (%p356) target = $region32
      $region31: #{tpu_custom_call.1} parent=5 // pred_region
        // Predicated region
        $region33: #{tpu_custom_call.1} parent=31 // pred_check
          %p359 = pneg %p72
        $region34: #{tpu_custom_call.1} parent=31 // pred_check_branch
          %361 = sbr.rel (%p359) target = $region36
        $region35: #{tpu_custom_call.1} parent=31 // pred_region
          %s362 = sand.u32 %s62, 1
          %s363 = scalar_lea.sflag [#allocation3], %s362
          %s364 = sand.u32 %s62, 1
          %s365 = smul.addr %s364, 8
          %s366 = scalar_lea.vmem [#allocation2], %s365
          %368 = vsyncadd %s363, 0
          %s369 = sadd.s32 %s38, %s37
          %s370 = smul.addr %s36, 2
          %s371 = sadd.s32 %s369, %s370
          %s372 = smul.addr %s371, 8
          %s373 = scalar_lea.hbm %s0, %s372
          %s375 = sshll.u32 %s373, 4
          %s376 = int_to_ptr.hbm [resolvable:$true] %s375
          %s377 = sshll.u32 %s366, 4
          %s378 = int_to_ptr.vmem [resolvable:$true] %s377
          %380 = dma.hbm_to_vmem [thread:$0]  %s376, 128, %s378, %s363
        $region36: #{tpu_custom_call.1} parent=31 // pred_fallthru
          _
        // Predicated region
        $region37: #{tpu_custom_call.1} parent=31 // pred_check
          %p381 = pneg %p100
        $region38: #{tpu_custom_call.1} parent=31 // pred_check_branch
          %383 = sbr.rel (%p381) target = $region40
        $region39: #{tpu_custom_call.1} parent=31 // pred_region
          %s384 = sand.u32 %s29, 1
          %s385 = scalar_lea.sflag [#allocation6], %s384
          %s386 = sand.u32 %s90, 1
          %s387 = smul.addr %s386, 8
          %s388 = scalar_lea.vmem [#allocation5], %s387
          %390 = vsyncadd %s385, 0
          %s391 = smul.addr %s36, 2
          %s392 = sadd.s32 %s37, %s391
          %s393 = smul.addr %s392, 8
          %s394 = scalar_lea.hbm %s1, %s393
          %s396 = sshll.u32 %s394, 4
          %s397 = int_to_ptr.hbm [resolvable:$true] %s396
          %s398 = sshll.u32 %s388, 4
          %s399 = int_to_ptr.vmem [resolvable:$true] %s398
          %401 = dma.hbm_to_vmem [thread:$0]  %s397, 128, %s399, %s385
        $region40: #{tpu_custom_call.1} parent=31 // pred_fallthru
          _
        // Predicated region
        $region41: #{tpu_custom_call.1} parent=31 // pred_check
          %p402 = pneg %p128
        $region42: #{tpu_custom_call.1} parent=31 // pred_check_branch
          %404 = sbr.rel (%p402) target = $region44
        $region43: #{tpu_custom_call.1} parent=31 // pred_region
          %s405 = sand.u32 %s29, 1
          %s406 = scalar_lea.sflag [#allocation6], %s405
          %s407 = sand.u32 %s118, 1
          %s408 = smul.addr %s407, 8
          %s409 = scalar_lea.vmem [#allocation7], %s408
          %411 = vsyncadd %s406, 0
          %s412 = smul.addr %s36, 2
          %s413 = sadd.s32 %s37, %s412
          %s414 = smul.addr %s413, 8
          %s415 = scalar_lea.hbm %s2, %s414
          %s417 = sshll.u32 %s415, 4
          %s418 = int_to_ptr.hbm [resolvable:$true] %s417
          %s419 = sshll.u32 %s409, 4
          %s420 = int_to_ptr.vmem [resolvable:$true] %s419
          %422 = dma.hbm_to_vmem [thread:$0]  %s418, 128, %s420, %s406
        $region44: #{tpu_custom_call.1} parent=31 // pred_fallthru
          _
        // Predicated region
        $region45: #{tpu_custom_call.1} parent=31 // pred_check
          %p423 = pneg %p240
        $region46: #{tpu_custom_call.1} parent=31 // pred_check_branch
          %425 = sbr.rel (%p423) target = $region48
        $region47: #{tpu_custom_call.1} parent=31 // pred_region
          %p426 = scmp.lt.s32.totalorder %s36, 1
          %s427 = scalar_select %p426, %s36, 1
          %p428 = scmp.lt.s32.totalorder %s38, 0
          %s429 = scalar_select %p428, %s38, 0
          %s430 = sadd.s32 %s429, %s427
          %s431 = smul.addr %s430, 2
          %s432 = scalar_lea.vmem %s7, %s431
        $region48: #{tpu_custom_call.1} parent=31 // pred_fallthru
          _
      $region32: #{tpu_custom_call.1} parent=5 // pred_fallthru
        _
      %p433 = scmp.le.s32.totalorder 1, %s29
      %p434 = scmp.lt.s32.totalorder %s29, 5
      %p435 = pnand %p433, %p434
      %p436 = pneg %p435
      // Predicated region
      $region49: #{tpu_custom_call.1} parent=5 // pred_check
        _
      $region50: #{tpu_custom_call.1} parent=5 // pred_check_branch
        %438 = sbr.rel (%p435) target = $region52
      $region51: #{tpu_custom_call.1} parent=5 // pred_region
        %s439 = ssub.s32 %s29, 1
        %s440 = sand.u32 %s65, 1
        %s441 = scalar_lea.sflag [#allocation3], %s440
        %s442 = sand.u32 %s65, 1
        %s443 = smul.addr %s442, 8
        %s444 = scalar_lea.vmem [#allocation2], %s443
        // Predicated region
        $region53: #{tpu_custom_call.1} parent=51 // pred_check
          %p445 = pneg %p78
        $region54: #{tpu_custom_call.1} parent=51 // pred_check_branch
          %447 = sbr.rel (%p445) target = $region56
        $region55: #{tpu_custom_call.1} parent=51 // pred_region
          %449 = dma.done %s441, 128
        $region56: #{tpu_custom_call.1} parent=51 // pred_fallthru
          _
        %s450 = sand.u32 %s34, 1
        %s451 = scalar_lea.sflag [#allocation6], %s450
        %s452 = sand.u32 %s93, 1
        %s453 = smul.addr %s452, 8
        %s454 = scalar_lea.vmem [#allocation5], %s453
        // Predicated region
        $region57: #{tpu_custom_call.1} parent=51 // pred_check
          %p455 = pneg %p106
        $region58: #{tpu_custom_call.1} parent=51 // pred_check_branch
          %457 = sbr.rel (%p455) target = $region60
        $region59: #{tpu_custom_call.1} parent=51 // pred_region
          %459 = dma.done %s451, 128
        $region60: #{tpu_custom_call.1} parent=51 // pred_fallthru
          _
        %s460 = sand.u32 %s34, 1
        %s461 = scalar_lea.sflag [#allocation6], %s460
        %s462 = sand.u32 %s121, 1
        %s463 = smul.addr %s462, 8
        %s464 = scalar_lea.vmem [#allocation7], %s463
        // Predicated region
        $region61: #{tpu_custom_call.1} parent=51 // pred_check
          %p465 = pneg %p134
        $region62: #{tpu_custom_call.1} parent=51 // pred_check_branch
          %467 = sbr.rel (%p465) target = $region64
        $region63: #{tpu_custom_call.1} parent=51 // pred_region
          %469 = dma.done %s461, 128
        $region64: #{tpu_custom_call.1} parent=51 // pred_fallthru
          _
        // Predicated region
        $region65: #{tpu_custom_call.1} parent=51 // pred_check
          %p470 = pneg %p155
        $region66: #{tpu_custom_call.1} parent=51 // pred_check_branch
          %472 = sbr.rel (%p470) target = $region68
        $region67: #{tpu_custom_call.1} parent=51 // pred_region
          %474 = dma.done [#allocation9], 512
        $region68: #{tpu_custom_call.1} parent=51 // pred_fallthru
          _
        // Predicated region
        $region69: #{tpu_custom_call.1} parent=51 // pred_check
          %p475 = pneg %p197
        $region70: #{tpu_custom_call.1} parent=51 // pred_check_branch
          %477 = sbr.rel (%p475) target = $region72
        $region71: #{tpu_custom_call.1} parent=51 // pred_region
          %479 = dma.done [#allocation9], 512
        $region72: #{tpu_custom_call.1} parent=51 // pred_fallthru
          _
        %s480 = sand.u32 %s65, 1
        %s481 = scalar_lea.sflag [#allocation3], %s480
        %s482 = sand.u32 %s65, 1
        %s483 = smul.addr %s482, 8
        %s484 = scalar_lea.vmem [#allocation2], %s483
        %p485 = pneg %p78
        %p486 = pneg %p75
        %s487 = sand.u32 %s34, 1
        %s488 = scalar_lea.sflag [#allocation6], %s487
        %s489 = sand.u32 %s93, 1
        %s490 = smul.addr %s489, 8
        %s491 = scalar_lea.vmem [#allocation5], %s490
        %p492 = pneg %p106
        %p493 = pneg %p103
        %s494 = sand.u32 %s34, 1
        %s495 = scalar_lea.sflag [#allocation6], %s494
        %s496 = sand.u32 %s121, 1
        %s497 = smul.addr %s496, 8
        %s498 = scalar_lea.vmem [#allocation7], %s497
        %p499 = pneg %p134
        %p500 = pneg %p131
        %p501 = pneg %p155
        %p502 = pneg %p152
        %p503 = pneg %p176
        %p504 = pneg %p173
        %p505 = pneg %p197
        %p506 = pneg %p194
        %p507 = pneg %p218
        %p508 = pneg %p215
        %p509 = scmp.lt.s32.totalorder %s39, 1
        %s510 = scalar_select %p509, %s39, 1
        %p511 = scmp.lt.s32.totalorder %s41, 0
        %s512 = scalar_select %p511, %s41, 0
        %s513 = sadd.s32 %s512, %s510
        %s514 = smul.addr %s513, 2
        %s515 = scalar_lea.vmem %s7, %s514
        %p516 = pneg %p246
        %p517 = pneg %p243
        %p518 = pneg %p276
        %p519 = pneg %p273
        %s520 = sand.u32 %s263, 1
        %s521 = scalar_lea.sflag [#allocation4], %s520
        %s522 = sand.u32 %s263, 1
        %s523 = smul.addr %s522, 8
        %s524 = scalar_lea.vmem [#allocation11], %s523
        %p525 = pneg %p306
        %p526 = pneg %p303
        %s527 = sand.u32 %s293, 1
        %s528 = scalar_lea.sflag [#allocation13], %s527
        %s529 = sand.u32 %s293, 1
        %s530 = smul.addr %s529, 8
        %s531 = scalar_lea.vmem [#allocation12], %s530
        %p532 = scmp.lt.s32.totalorder %s39, 1
        %s533 = scalar_select %p532, %s39, 1
        %p534 = scmp.lt.s32.totalorder %s41, 0
        %s535 = scalar_select %p534, %s41, 0
        %s536 = sadd.s32 %s535, %s533
        %s537 = smul.addr %s536, 2
        %s538 = scalar_lea.vmem %s7, %s537
        %v541 = vld [vmem:[%s444] sm:$0xff]
        %v542 = vld [vmem:[%s454] sm:$0xff]
        %v543 = vld [vmem:[%s464] sm:$0xff]
        %v544 = vld [vmem:[#allocation8] sm:$0xff]
        %v545 = vld [vmem:[#allocation8 + $0x8] sm:$0xff]
        %v546 = vld [vmem:[#allocation8 + $0x10] sm:$0xff]
        %v547 = vld [vmem:[#allocation8 + $0x18] sm:$0xff]
        %v548 = vld [vmem:[%s4] sm:$0x1]
        %v550 = vperm.slane %v548, 0
        %vm552 = vcmask 261120
        %v554 = vsel %vm552, %v541, 0
        %556 = vmatpush.msra.mxu0 0.0
        %557 = vmatpush.msra.mxu0 0.0
        %558 = vmatpush.msra.mxu0 0.0
        %559 = vmatpush.msra.mxu0 0.0
        %560 = vmatpush.msra.mxu0 0.0
        %561 = vmatpush.msra.mxu0 0.0
        %562 = vmatpush.msra.mxu0 0.0
        %563 = vmatpush.msra.mxu0 0.0
        %564 = vmatpush.msra.mxu0 0.0
        %565 = vmatpush.msra.mxu0 0.0
        %566 = vmatpush.msra.mxu0 0.0
        %567 = vmatpush.msra.mxu0 0.0
        %568 = vmatpush.msra.mxu0 %v547
        %569 = vmatpush.msra.mxu0 %v546
        %570 = vmatpush.msra.mxu0 %v545
        %571 = vmatpush.msra.mxu0 %v544
        %572 = vmatmul.f32.gmra.mxu0 %v554
        %v573 = vpop.f32.mrf.mxu0
        %v574 = vadd.f32 %v550, %v573
        %575 = vdwg.mxu0
        %v576 = vld [vmem:[#allocation10] sm:$0xff]
        %v577 = vld [vmem:[#allocation10 + $0x8] sm:$0xff]
        %v578 = vld [vmem:[#allocation10 + $0x10] sm:$0xff]
        %v579 = vld [vmem:[#allocation10 + $0x18] sm:$0xff]
        %v580 = vld [vmem:[%s6] sm:$0x1]
        %v582 = vperm.slane %v580, 0
        %v585 = vsel %vm552, %v542, 0
        %587 = vmatpush.msra.mxu0 0.0
        %588 = vmatpush.msra.mxu0 0.0
        %589 = vmatpush.msra.mxu0 0.0
        %590 = vmatpush.msra.mxu0 0.0
        %591 = vmatpush.msra.mxu0 0.0
        %592 = vmatpush.msra.mxu0 0.0
        %593 = vmatpush.msra.mxu0 0.0
        %594 = vmatpush.msra.mxu0 0.0
        %595 = vmatpush.msra.mxu0 0.0
        %596 = vmatpush.msra.mxu0 0.0
        %597 = vmatpush.msra.mxu0 0.0
        %598 = vmatpush.msra.mxu0 0.0
        %599 = vmatpush.msra.mxu0 %v579
        %600 = vmatpush.msra.mxu0 %v578
        %601 = vmatpush.msra.mxu0 %v577
        %602 = vmatpush.msra.mxu0 %v576
        %603 = vmatmul.f32.gmra.mxu0 %v585
        %v604 = vpop.f32.mrf.mxu0
        %v605 = vadd.f32 %v582, %v604
        %606 = vdwg.mxu0
        %607 = vmatpush.xpose.msra.mxu0 0.0
        %608 = vmatpush.xpose.msra.mxu0 0.0
        %609 = vmatpush.xpose.msra.mxu0 0.0
        %610 = vmatpush.xpose.msra.mxu0 0.0
        %611 = vmatpush.xpose.msra.mxu0 0.0
        %612 = vmatpush.xpose.msra.mxu0 0.0
        %613 = vmatpush.xpose.msra.mxu0 0.0
        %614 = vmatpush.xpose.msra.mxu0 0.0
        %615 = vmatpush.xpose.msra.mxu0 0.0
        %616 = vmatpush.xpose.msra.mxu0 0.0
        %617 = vmatpush.xpose.msra.mxu0 0.0
        %618 = vmatpush.xpose.msra.mxu0 0.0
        %619 = vmatpush.xpose.msra.mxu0 0.0
        %620 = vmatpush.xpose.msra.mxu0 0.0
        %621 = vmatpush.xpose.msra.mxu0 0.0
        %622 = vmatpush.xpose.msra.mxu0 %v605
        %623 = vmatmul.f32.gmra.mxu0 %v574
        %v624 = vpop.f32.mrf.mxu0
        %v625 = vadd.f32 0.0, %v624
        %626 = vdwg.mxu0
        %v627 = vld [vmem:[%s538] sm:$0x3]
        %vm628 = vnez %v627
        %v629 = vsel %vm628, 16843009, 0
        %v630 = vunpack.c.0.s8 %v629
        %vm631 = vcmp.ne.s32.totalorder %v630, 0
        %v632 = vsel %vm631, -1e+09, %v625
        %vm633 = vcmask 64512
        %v634 = vsel %vm633, %v632, -inf
        %635 = vmax.xlane.f32.xlu0 %v634
        %v636 = vpop.xlane.xlu0 %635
        %v637 = vsub.f32 %v632, %v636
        %v638 = vmul.f32 %v637, 1.442695
        %v639 = vpow.pop %v638
        %v640 = vsel %vm633, %v639, 0.0
        %641 = vadd.xlane.f32.xlu0 %v640
        %v642 = vpop.xlane.xlu0 %641
        %v643 = vrcp.pop %v642
        %v644 = vmul.f32 %v642, %v643
        %v645 = vsub.f32 2.0, %v644
        %v646 = vmul.f32 %v643, %v645
        %v647 = vmul.f32 %v639, %v646
        %648 = vst.msk [vmem:[%s531] sm:$0xff] %vm633, %v647
        %v650 = vsel %vm633, %v647, 0
        %652 = vmatpush.msra.mxu0 0.0
        %653 = vmatpush.msra.mxu0 0.0
        %654 = vmatpush.msra.mxu0 0.0
        %655 = vmatpush.msra.mxu0 0.0
        %656 = vmatpush.msra.mxu0 0.0
        %657 = vmatpush.msra.mxu0 0.0
        %658 = vmatpush.msra.mxu0 0.0
        %659 = vmatpush.msra.mxu0 0.0
        %660 = vmatpush.msra.mxu0 0.0
        %661 = vmatpush.msra.mxu0 0.0
        %662 = vmatpush.msra.mxu0 0.0
        %663 = vmatpush.msra.mxu0 0.0
        %664 = vmatpush.msra.mxu0 0.0
        %665 = vmatpush.msra.mxu0 0.0
        %666 = vmatpush.msra.mxu0 0.0
        %667 = vmatpush.msra.mxu0 %v543
        %668 = vmatmul.f32.gmra.mxu0 %v650
        %v669 = vpop.f32.mrf.mxu0
        %v670 = vadd.f32 0.0, %v669
        %671 = vdwg.mxu0
        %672 = vst.msk [vmem:[%s524] sm:$0xff] %vm552, %v670
        %s673 = sand.u32 %s263, 1
        %s674 = scalar_lea.sflag [#allocation4], %s673
        %s675 = sand.u32 %s263, 1
        %s676 = smul.addr %s675, 8
        %s677 = scalar_lea.vmem [#allocation11], %s676
        %s678 = sand.u32 %s293, 1
        %s679 = scalar_lea.sflag [#allocation13], %s678
        %s680 = sand.u32 %s293, 1
        %s681 = smul.addr %s680, 8
        %s682 = scalar_lea.vmem [#allocation12], %s681
        // Predicated region
        $region73: #{tpu_custom_call.1} parent=51 // pred_check
          %p683 = pneg %p273
        $region74: #{tpu_custom_call.1} parent=51 // pred_check_branch
          %685 = sbr.rel (%p683) target = $region76
        $region75: #{tpu_custom_call.1} parent=51 // pred_region
          %687 = vsyncadd %s674, 0
          %s688 = sadd.s32 %s41, %s40
          %s689 = smul.addr %s39, 2
          %s690 = sadd.s32 %s688, %s689
          %s691 = smul.addr %s690, 8
          %s692 = scalar_lea.hbm %s8, %s691
          %s694 = sshll.u32 %s677, 4
          %s695 = int_to_ptr.vmem [resolvable:$true] %s694
          %s696 = sshll.u32 %s692, 4
          %s697 = int_to_ptr.hbm [resolvable:$true] %s696
          %699 = dma.vmem_to_hbm [thread:$0]  %s695, 128, %s697, %s674
        $region76: #{tpu_custom_call.1} parent=51 // pred_fallthru
          _
        // Predicated region
        $region77: #{tpu_custom_call.1} parent=51 // pred_check
          %p700 = pneg %p303
        $region78: #{tpu_custom_call.1} parent=51 // pred_check_branch
          %702 = sbr.rel (%p700) target = $region80
        $region79: #{tpu_custom_call.1} parent=51 // pred_region
          %704 = vsyncadd %s679, 0
          %s705 = sadd.s32 %s41, %s40
          %s706 = smul.addr %s39, 2
          %s707 = sadd.s32 %s705, %s706
          %s708 = smul.addr %s707, 8
          %s709 = scalar_lea.hbm %s9, %s708
          %s711 = sshll.u32 %s682, 4
          %s712 = int_to_ptr.vmem [resolvable:$true] %s711
          %s713 = sshll.u32 %s709, 4
          %s714 = int_to_ptr.hbm [resolvable:$true] %s713
          %716 = dma.vmem_to_hbm [thread:$0]  %s712, 128, %s714, %s679
        $region80: #{tpu_custom_call.1} parent=51 // pred_fallthru
          _
      $region52: #{tpu_custom_call.1} parent=5 // pred_fallthru
        _
      %p717 = scmp.le.s32.totalorder 2, %s29
      // Predicated region
      $region81: #{tpu_custom_call.1} parent=5 // pred_check
        %p718 = pneg %p717
      $region82: #{tpu_custom_call.1} parent=5 // pred_check_branch
        %720 = sbr.rel (%p718) target = $region84
      $region83: #{tpu_custom_call.1} parent=5 // pred_region
        %s721 = ssub.s32 %s29, 2
        // Predicated region
        $region85: #{tpu_custom_call.1} parent=83 // pred_check
          %p722 = pneg %p279
        $region86: #{tpu_custom_call.1} parent=83 // pred_check_branch
          %724 = sbr.rel (%p722) target = $region88
        $region87: #{tpu_custom_call.1} parent=83 // pred_region
          %s725 = sand.u32 %s264, 1
          %s726 = scalar_lea.sflag [#allocation4], %s725
          %s727 = sand.u32 %s264, 1
          %s728 = smul.addr %s727, 8
          %s729 = scalar_lea.vmem [#allocation11], %s728
          %731 = dma.done %s726, 128
        $region88: #{tpu_custom_call.1} parent=83 // pred_fallthru
          _
        // Predicated region
        $region89: #{tpu_custom_call.1} parent=83 // pred_check
          %p732 = pneg %p309
        $region90: #{tpu_custom_call.1} parent=83 // pred_check_branch
          %734 = sbr.rel (%p732) target = $region92
        $region91: #{tpu_custom_call.1} parent=83 // pred_region
          %s735 = sand.u32 %s294, 1
          %s736 = scalar_lea.sflag [#allocation13], %s735
          %s737 = sand.u32 %s294, 1
          %s738 = smul.addr %s737, 8
          %s739 = scalar_lea.vmem [#allocation12], %s738
          %741 = dma.done %s736, 128
        $region92: #{tpu_custom_call.1} parent=83 // pred_fallthru
          _
      $region84: #{tpu_custom_call.1} parent=5 // pred_fallthru
        _
    $region6: #{tpu_custom_call.1} parent=1 // loop_footer
      %s33 = sadd.s32 1, %s29
    $region7: #{tpu_custom_call.1} parent=1 // loop_footer_branch
      %28 = sbr.rel target = $region3
    $region8: #{tpu_custom_call.1} parent=1 // loop_exit
      _
    %742 = vsyncpa [#allocation3], 1
    %s743 = scalar_lea.sflag [#allocation3], 1
    %744 = vsyncpa %s743, 1
    %745 = vsyncpa [#allocation6], 1
    %s746 = scalar_lea.sflag [#allocation6], 1
    %747 = vsyncpa %s746, 1
    %748 = vsyncpa [#allocation9], 1
    %749 = vsyncpa [#allocation4], 1
    %s750 = scalar_lea.sflag [#allocation4], 1
    %751 = vsyncpa %s750, 1
    %752 = vsyncpa [#allocation13], 1
    %s753 = scalar_lea.sflag [#allocation13], 1
    %754 = vsyncpa %s753, 1

</llo_original>
